<compile_context>
chip_gen: v6e
topology: v6e:2x2x1
jax: 0.10.0
libtpu: 0.0.40
codegen_flags: <defaults>
</compile_context>

<pallas_src>
import math

import numpy as np
import jax
import jax.numpy as jnp
from jax.experimental import pallas as pl
from jax.experimental.pallas import tpu as pltpu


def _layer_scale_kernel(x_ref, g_ref, o_ref):
    # (TR, D) * (1, D) -> (TR, D); single cast at the store.
    o_ref[...] = (x_ref[...] * g_ref[...]).astype(o_ref.dtype)


def _layer_scale_mask_kernel(x_ref, g_ref, m_ref, o_ref):
    # mask block is (TR, 1) or (TR, D); jnp broadcasting handles both.
    o_ref[...] = (x_ref[...] * g_ref[...] * m_ref[...]).astype(o_ref.dtype)


def _pick_row_tile(n_rows, row_bytes, n_full_operands, budget_bytes=12 * 1024 * 1024):
    """Row tile so that all double-buffered full-size blocks fit the budget."""
    per_block = budget_bytes // max(1, 2 * n_full_operands)   # 2 = double buffering
    rows = max(8, per_block // max(1, row_bytes))
    rows = int(rows) // 8 * 8                                  # sublane-aligned
    if rows >= n_rows:
        return n_rows                                          # full-extent block is always legal
    return rows


def layer_scale(inputs, gamma, mask=None, *, row_tile=None, donate=False):
    """Pallas implementation of LayerScale.forward (inputs * gamma [* mask])."""
    inputs = jnp.asarray(inputs)
    gamma = jnp.asarray(gamma)
    d = inputs.shape[-1]
    assert gamma.shape == (d,), "gamma must have shape (projection_dim,)"

    lead = inputs.shape[:-1]
    n_rows = int(np.prod(lead)) if lead else 1

    # --- classify the optional mask -------------------------------------------------
    mask_kind = None            # None | "row" (per-row scalar) | "full" (same shape as x)
    m_arr = None
    if mask is not None:
        m_arr = jnp.asarray(mask, dtype=inputs.dtype)
        if m_arr.shape == inputs.shape:
            mask_kind = "full"
        elif m_arr.shape == lead + (1,) or m_arr.shape == lead:
            mask_kind = "row"
        else:
            m_arr = jnp.broadcast_to(m_arr, inputs.shape)
            mask_kind = "full"

    # --- lane-density fold ----------------------------------------------------------
    fold = 1
    if d % 128 != 0:
        f = 128 // math.gcd(d, 128)
        # only fold when it is a pure reshape and the mask folds the same way
        if f > 1 and n_rows % f == 0 and mask_kind != "row":
            fold = f

    rows_eff = n_rows // fold
    d_eff = d * fold

    x2 = inputs.reshape(rows_eff, d_eff)
    g2 = (jnp.tile(gamma, fold) if fold > 1 else gamma).reshape(1, d_eff)

    operands = [x2, g2]
    n_full = 2  # x + out (full-size HBM streams)
    if mask_kind == "full":
        operands.append(m_arr.reshape(rows_eff, d_eff))
        n_full = 3
    elif mask_kind == "row":
        operands.append(m_arr.reshape(n_rows, 1))

    if row_tile is None:
        row_tile = _pick_row_tile(rows_eff, d_eff * x2.dtype.itemsize, n_full)
    row_tile = min(row_tile, rows_eff)

    grid = (pl.cdiv(rows_eff, row_tile),)

    x_spec = pl.BlockSpec((row_tile, d_eff), lambda i: (i, 0))
    g_spec = pl.BlockSpec((1, d_eff), lambda i: (0, 0))
    out_spec = pl.BlockSpec((row_tile, d_eff), lambda i: (i, 0))

    in_specs = [x_spec, g_spec]
    kernel = _layer_scale_kernel
    if mask_kind == "full":
        in_specs.append(pl.BlockSpec((row_tile, d_eff), lambda i: (i, 0)))
        kernel = _layer_scale_mask_kernel
    elif mask_kind == "row":
        in_specs.append(pl.BlockSpec((row_tile, 1), lambda i: (i, 0)))
        kernel = _layer_scale_mask_kernel

    out = pl.pallas_call(
        kernel,
        out_shape=jax.ShapeDtypeStruct((rows_eff, d_eff), inputs.dtype),
        grid_spec=pltpu.PrefetchScalarGridSpec(
            num_scalar_prefetch=0,
            grid=grid,
            in_specs=in_specs,
            out_specs=out_spec,
        ),
        compiler_params=pltpu.CompilerParams(
            dimension_semantics=("parallel",),
        ),
        # Optional: alias x -> out when the caller donates x (saves the output
        # HBM allocation when this runs per-layer in training).
        input_output_aliases=({0: 0} if donate else {}),
    )(*operands)

    return out.reshape(inputs.shape)


if __name__ == "__main__":
    key = jax.random.PRNGKey(0)
    k1, k2, k3, k4 = jax.random.split(key, 4)

    # Shapes implied by the module: (batch, seq, projection_dim) with a
    # per-token mask of shape (batch, seq, 1).
    batch, seq, proj_dim = 2, 8, 32
    init_values = 0.1

    x = jax.random.normal(k1, (batch, seq, proj_dim), dtype=jnp.float32)
    gamma = jnp.full((proj_dim,), init_values, dtype=jnp.float32)
    mask_row = (jax.random.uniform(k2, (batch, seq, 1)) > 0.3).astype(jnp.float32)
    mask_full = (jax.random.uniform(k4, (batch, seq, proj_dim)) > 0.3).astype(jnp.float32)

    # no-mask path (lane-dense folded: 16 rows x 32 -> 4 rows x 128)
    y = jax.block_until_ready(layer_scale(x, gamma))
    y_ref = np.asarray(x) * np.asarray(gamma)
    np.testing.assert_allclose(np.asarray(y), y_ref, rtol=1e-6, atol=1e-6)

    # per-token mask path (unfolded, mask streamed as (R, 1))
    ym = jax.block_until_ready(layer_scale(x, gamma, mask_row))
    ym_ref = np.asarray(x) * np.asarray(gamma) * np.asarray(mask_row)
    np.testing.assert_allclose(np.asarray(ym), ym_ref, rtol=1e-6, atol=1e-6)

    # full-shape mask path (folded together with x)
    yf = jax.block_until_ready(layer_scale(x, gamma, mask_full))
    yf_ref = np.asarray(x) * np.asarray(gamma) * np.asarray(mask_full)
    np.testing.assert_allclose(np.asarray(yf), yf_ref, rtol=1e-6, atol=1e-6)

    # ragged-grid path: rows (2*9=18) not a multiple of fold or the row tile,
    # exercising the unfolded layout + cdiv grid + masked boundary block.
    xr = jax.random.normal(k3, (2, 9, proj_dim), dtype=jnp.float32)
    yr = jax.block_until_ready(layer_scale(xr, gamma, row_tile=8))
    np.testing.assert_allclose(np.asarray(yr),
                               np.asarray(xr) * np.asarray(gamma),
                               rtol=1e-6, atol=1e-6)

    print("KERNEL_OK")
</pallas_src>

<mosaic_0001>
module attributes {stable_mosaic.version = 11 : i64} {
  func.func @_layer_scale_kernel(%arg0: i32, %arg1: memref<4x128xf32, #tpu.memory_space<vmem>>, %arg2: memref<1x128xf32, #tpu.memory_space<vmem>>, %arg3: memref<4x128xf32, #tpu.memory_space<vmem>>) attributes {dimension_semantics = [#tpu.dimension_semantics<parallel>], iteration_bounds = array<i64: 1>, scalar_prefetch = 0 : i64, scratch_operands = 0 : i64, tpu.core_type = #tpu.core_type<tc>, window_params = [{transform_indices = @transform_0, window_bounds = array<i64: 4, 128>}, {pipeline_mode = #tpu.pipeline_mode<synchronous>, transform_indices = @transform_1, window_bounds = array<i64: 1, 128>}, {transform_indices = @transform_2, window_bounds = array<i64: 4, 128>}]} {
    %c0 = arith.constant 0 : index
    %c0_0 = arith.constant 0 : index
    %0 = vector.load %arg1[%c0, %c0_0] : memref<4x128xf32, #tpu.memory_space<vmem>>, vector<4x128xf32>
    %c0_1 = arith.constant 0 : index
    %c0_2 = arith.constant 0 : index
    %1 = vector.load %arg2[%c0_1, %c0_2] : memref<1x128xf32, #tpu.memory_space<vmem>>, vector<1x128xf32>
    %2 = vector.broadcast %1 : vector<1x128xf32> to vector<4x128xf32>
    %3 = arith.mulf %0, %2 : vector<4x128xf32>
    %c0_3 = arith.constant 0 : index
    %c0_4 = arith.constant 0 : index
    %4 = vector.load %arg3[%c0_3, %c0_4] : memref<4x128xf32, #tpu.memory_space<vmem>>, vector<4x128xf32>
    tpu.vector_store %arg3[%c0_3, %c0_4], %3 {strides = array<i32>} : memref<4x128xf32, #tpu.memory_space<vmem>>, vector<4x128xf32>,
    return
  }
  func.func @transform_0(%arg0: i32) -> (i32, i32) {
    %c0_i32 = arith.constant 0 : i32
    %c0_i32_0 = arith.constant 0 : i32
    return %arg0, %c0_i32 : i32, i32
  }
  func.func @transform_1(%arg0: i32) -> (i32, i32) {
    %c0_i32 = arith.constant 0 : i32
    %c0_i32_0 = arith.constant 0 : i32
    %c0_i32_1 = arith.constant 0 : i32
    return %c0_i32, %c0_i32_0 : i32, i32
  }
  func.func @transform_2(%arg0: i32) -> (i32, i32) {
    %c0_i32 = arith.constant 0 : i32
    %c0_i32_0 = arith.constant 0 : i32
    return %arg0, %c0_i32 : i32, i32
  }
}

</mosaic_0001>

<llo_original>
// kernel: tpu_custom_call.1
$region0: #{tpu_custom_call.1}
  #allocation0 [shape = 'u32[]', space=smem, size = 0x4, offset = 0x4, fixed_abs, tag = 'smem constant byte address 0x4 - core index']
  #allocation1 [shape = 'u32[144,128]{1,0:T(1,128)}', space=vmem, size = 0x12000, scoped, tag = 'internal scratch']
  %s0 = inlined_call_operand.hbm [shape: f32[4,128], index: 0, kind: input, shape index: {}]
  %s1 = inlined_call_operand.vmem [shape: f32[1,128], index: 1, kind: input, shape index: {}]
  %s2 = inlined_call_operand.hbm [shape: f32[4,128], index: 2, kind: output, shape index: {}]
  %s3 = sld [smem:[#allocation0]]
  $region22: #{tpu_custom_call.1} parent=0
    _
  %s5 = ssub.s32 1, %s3
  %s6 = scalar_select 0, %s5, %s3
  $region1: #{tpu_custom_call.1} parent=0
    #allocation2 [shape = 'u8[2048]{0}', space=vmem, size = 0x800, scoped, tag = 'input window, operand 0, single buffered']
    #allocation3 [shape = 's32[1]{0}', space=sflag, size = 0x4, scoped, tag = 'scoped memory for tpu_custom_call.1']
    #allocation4 [shape = 's32[1]{0}', space=sflag, size = 0x4, scoped, tag = 'scoped memory for tpu_custom_call.1']
    #allocation5 [shape = 'u8[2048]{0}', space=vmem, size = 0x800, scoped, tag = 'output window, operand 0, single buffered']
    %7 = vsyncpa [#allocation3], 0
    %8 = vsyncpa [#allocation4], 0
    // Predicated region
    $region2: #{tpu_custom_call.1} parent=1 // pred_check
      _
    $region3: #{tpu_custom_call.1} parent=1 // pred_check_branch
      %10 = sbr.rel (0) target = $region5
    $region4: #{tpu_custom_call.1} parent=1 // pred_region
      %s12 = ssub.s32 64, 64
      %13 = vsyncadd [#allocation3], %s12
      %s15 = sshll.u32 [#allocation2], 4
      %s16 = int_to_ptr.vmem [resolvable:$true] %s15
      %18 = dma.hbm_to_vmem [thread:$0]  %s0, 64, %s16, [#allocation3]
    $region5: #{tpu_custom_call.1} parent=1 // pred_fallthru
      _
    // Predicated region
    $region6: #{tpu_custom_call.1} parent=1 // pred_check
      _
    $region7: #{tpu_custom_call.1} parent=1 // pred_check_branch
      %20 = sbr.rel (0) target = $region9
    $region8: #{tpu_custom_call.1} parent=1 // pred_region
      _
    $region9: #{tpu_custom_call.1} parent=1 // pred_fallthru
      _
    // Predicated region
    $region10: #{tpu_custom_call.1} parent=1 // pred_check
      _
    $region11: #{tpu_custom_call.1} parent=1 // pred_check_branch
      %22 = sbr.rel (0) target = $region13
    $region12: #{tpu_custom_call.1} parent=1 // pred_region
      %23 = dma.done [#allocation3], 64
    $region13: #{tpu_custom_call.1} parent=1 // pred_fallthru
      _
    %v24 = vld [vmem:[#allocation2] sm:$0xf]
    %v25 = vld [vmem:[%s1] sm:$0x1]
    %v27 = vlaneseq
    %v28 = vshrl.u32 %v27, 7
    %v29 = vsub.s32 0, %v28
    %v30 = vrot.slane %v25, %v29
    %v32 = vmul.f32 %v24, %v30
    %33 = vst [vmem:[#allocation5] sm:$0xf] %v32
    // Predicated region
    $region14: #{tpu_custom_call.1} parent=1 // pred_check
      _
    $region15: #{tpu_custom_call.1} parent=1 // pred_check_branch
      %35 = sbr.rel (0) target = $region17
    $region16: #{tpu_custom_call.1} parent=1 // pred_region
      %s37 = ssub.s32 64, 64
      %38 = vsyncadd [#allocation4], %s37
      %s40 = sshll.u32 [#allocation5], 4
      %s41 = int_to_ptr.vmem [resolvable:$true] %s40
      %43 = dma.vmem_to_hbm [thread:$0]  %s41, 64, %s2, [#allocation4]
    $region17: #{tpu_custom_call.1} parent=1 // pred_fallthru
      _
    // Predicated region
    $region18: #{tpu_custom_call.1} parent=1 // pred_check
      _
    $region19: #{tpu_custom_call.1} parent=1 // pred_check_branch
      %45 = sbr.rel (0) target = $region21
    $region20: #{tpu_custom_call.1} parent=1 // pred_region
      %46 = dma.done [#allocation4], 64
    $region21: #{tpu_custom_call.1} parent=1 // pred_fallthru
      _
    %47 = vsyncpa [#allocation3], 1
    %48 = vsyncpa [#allocation4], 1

</llo_original>
